<compile_context>
chip_gen: v7x
topology: tpu7x:2x2x1
jax: 0.10.0
libtpu: 0.0.40
codegen_flags: <defaults>
</compile_context>

<pallas_src>
import functools
import math

import jax
import jax.numpy as jnp
import numpy as np
from jax.experimental import pallas as pl
from jax.experimental.pallas import tpu as pltpu


def _cdiv(a, b):
    return -(-a // b)


def _round_down(v, m):
    return (v // m) * m


def _vmem_limit(needed_bytes):
    # Explicit scoped-VMEM cap: at least the v6e/v7x 32 MiB default (also lifts
    # v5e's 16 MiB default) and at least what the blocks actually need.  With
    # the default 2 MiB block target this stays well under v7x's 64 MiB physical.
    return int(max(32 * 1024 * 1024, needed_bytes))


# ----------------------------------------------------------------------------
# Kernels: pure broadcast adds (PE precomputed outside; mem-bound bodies).
# ----------------------------------------------------------------------------
def _add_bcast_kernel(x_ref, pe_ref, o_ref):
    # x_ref: (ts, tb, E);  pe_ref: (ts, 1, E) f32.  Add in f32, cast back.
    o_ref[...] = (x_ref[...].astype(jnp.float32) + pe_ref[...]).astype(o_ref.dtype)


def _add_flat_kernel(reps, x_ref, pe_ref, o_ref):
    # x_ref: (ts, W);  pe_ref: (ts, P) f32 with W == reps * P.  Replicate the
    # PE lane-period across the block (128-lane-aligned vreg copies, no XLU).
    pe = pe_ref[...]
    if reps > 1:
        pe = jnp.tile(pe, (1, reps))
    o_ref[...] = (x_ref[...].astype(jnp.float32) + pe).astype(o_ref.dtype)


# ----------------------------------------------------------------------------
# PE table (computed once in plain JAX; tiny vs x).
# ----------------------------------------------------------------------------
def _make_pe(num_rows, embedding_size):
    """Sin/cos positional-encoding table, (num_rows, E) float32, torch-interleaved."""
    e = embedding_size
    den = jnp.exp(-jnp.arange(0, e, 2, dtype=jnp.float32) * (math.log(10000.0) / e))
    pos = jnp.arange(num_rows, dtype=jnp.float32)[:, None]        # (rows, 1)
    arg = pos * den                                               # (rows, E//2)
    # interleave -> [sin0, cos0, sin1, cos1, ...] == PE[:,0::2]=sin, PE[:,1::2]=cos
    return jnp.stack([jnp.sin(arg), jnp.cos(arg)], axis=-1).reshape(num_rows, e)


# ----------------------------------------------------------------------------
# Wrapper
# ----------------------------------------------------------------------------
def positional_encoding(x, *, target_block_bytes=2 << 20):
    """x: (S, B, E).  Returns x + PE[:S, None, :] (eval-mode dropout = identity)."""
    S, B, E = x.shape
    assert B >= S, "torch broadcast requires x.shape[1] >= x.shape[0]"
    assert E % 2 == 0, "odd embedding_size shape-mismatches in the torch module too"

    itemsize = jnp.dtype(x.dtype).itemsize
    pe = _make_pe(S, E)                     # (S, E) f32 -- only the S rows we need

    if E % 128 == 0:
        # ---- lane-dense already: tile both the PE-row axis and (if needed) B.
        row_full = B * E * itemsize
        if row_full <= target_block_bytes:
            tb = B
            ts = min(S, max(1, target_block_bytes // row_full))
        else:
            ts = 1
            tb = max(8, _round_down(target_block_bytes // (E * itemsize), 8))
            if tb >= B:
                tb = B
        # >= 2 grid steps so both v7x TensorCores get work (cheap on 1-TC chips).
        if _cdiv(S, ts) * _cdiv(B, tb) < 2:
            if S >= 2:
                ts = _cdiv(S, 2)
            elif B >= 16:
                tb = max(8, _round_down(_cdiv(B, 2), 8))
        grid = (_cdiv(S, ts), _cdiv(B, tb))

        x_blk = ts * tb * E * itemsize
        pe_blk = ts * E * 4
        needed = 2 * (2 * x_blk + pe_blk) + 2 * ts * tb * E * 4 + (1 << 20)
        cost = pl.CostEstimate(
            flops=S * B * E,
            transcendentals=0,
            bytes_accessed=2 * S * B * E * itemsize + grid[1] * S * E * 4,
        )
        return pl.pallas_call(
            _add_bcast_kernel,
            out_shape=jax.ShapeDtypeStruct((S, B, E), x.dtype),
            grid=grid,
            in_specs=[
                pl.BlockSpec((ts, tb, E), lambda i, j: (i, j, 0)),
                pl.BlockSpec((ts, 1, E), lambda i, j: (i, 0, 0)),   # compact PE block
            ],
            out_specs=pl.BlockSpec((ts, tb, E), lambda i, j: (i, j, 0)),
            compiler_params=pltpu.CompilerParams(
                dimension_semantics=("parallel", "parallel"),
                vmem_limit_bytes=_vmem_limit(needed),
            ),
            cost_estimate=cost,
        )(x, pe[:, None, :])

    # ---- E not a multiple of 128: flatten to (S, B*E) for lane-dense stores.
    # Stream only a lane-period PE tile of width P = lcm(E, 128); the kernel
    # replicates it across the block's lanes (no expanded (S, B*E) PE in HBM).
    BE = B * E
    P = math.lcm(E, 128)
    n_periods = _cdiv(BE, P)
    pe_period = jnp.tile(pe, (1, P // E))   # (S, P) f32 -- small

    ts_min = S if S < 8 else 8              # row block must be mult-of-8 or == S
    r = max(1, (target_block_bytes // max(1, ts_min * itemsize)) // P)
    W = min(r, n_periods) * P               # lane-block width: multiple of P (and 128)
    ts = max(ts_min, _round_down(target_block_bytes // (W * itemsize), 8))
    if ts >= S:
        ts = S
    # >= 2 grid steps so both v7x TensorCores get work.
    if _cdiv(S, ts) * _cdiv(BE, W) < 2:
        if n_periods >= 2:
            W = _cdiv(n_periods, 2) * P
        elif S >= 16:
            ts = _round_down(_cdiv(S, 2) + 7, 8)
    reps = W // P
    grid = (_cdiv(S, ts), _cdiv(BE, W))

    x_flat = x.reshape(S, BE)
    x_blk = ts * W * itemsize
    pe_blk = ts * P * 4
    needed = 2 * (2 * x_blk + pe_blk) + 2 * ts * W * 4 + (1 << 20)
    cost = pl.CostEstimate(
        flops=S * BE,
        transcendentals=0,
        bytes_accessed=2 * S * BE * itemsize + grid[1] * S * P * 4,
    )
    out_flat = pl.pallas_call(
        functools.partial(_add_flat_kernel, reps),
        out_shape=jax.ShapeDtypeStruct((S, BE), x.dtype),
        grid=grid,
        in_specs=[
            pl.BlockSpec((ts, W), lambda i, j: (i, j)),
            pl.BlockSpec((ts, P), lambda i, j: (i, 0)),   # lane-period PE tile
        ],
        out_specs=pl.BlockSpec((ts, W), lambda i, j: (i, j)),
        compiler_params=pltpu.CompilerParams(
            dimension_semantics=("parallel", "parallel"),
            vmem_limit_bytes=_vmem_limit(needed),
        ),
        cost_estimate=cost,
    )(x_flat, pe_period)
    return out_flat.reshape(S, B, E)


# ----------------------------------------------------------------------------
# Reference (mirrors the torch module bit-for-bit in f32 numpy).
# ----------------------------------------------------------------------------
def _reference(x):
    x = np.asarray(x, dtype=np.float32)
    S, B, E = x.shape
    den = np.exp(-np.arange(0, E, 2, dtype=np.float32) * math.log(10000.0) / E)
    pos = np.arange(B, dtype=np.float32).reshape(B, 1)
    pe = np.zeros((B, E), dtype=np.float32)
    pe[:, 0::2] = np.sin(pos * den)
    pe[:, 1::2] = np.cos(pos * den)
    return x + pe[:S, None, :]


if __name__ == "__main__":
    key = jax.random.PRNGKey(0)
    k1, k2, k3 = jax.random.split(key, 3)

    # Case 1: embedding_size=32 (module's config), E < 128 -> flattened
    # lane-dense path with in-kernel PE lane-period broadcast.
    S1, B1, E1 = 6, 8, 32
    x1 = jax.random.normal(k1, (S1, B1, E1), dtype=jnp.float32)
    out1 = jax.block_until_ready(positional_encoding(x1))
    np.testing.assert_allclose(np.asarray(out1), _reference(x1), rtol=1e-5, atol=1e-5)

    # Case 2: E % 128 == 0 -> 3-D path, row+batch tiling, compact (ts,1,E) PE.
    S2, B2, E2 = 16, 24, 128
    x2 = jax.random.normal(k2, (S2, B2, E2), dtype=jnp.float32)
    out2 = jax.block_until_ready(positional_encoding(x2))
    np.testing.assert_allclose(np.asarray(out2), _reference(x2), rtol=1e-5, atol=1e-5)

    # Case 3: bf16 input, E % 128 == 0 -> f32 in-kernel add, bf16 output.
    S3, B3, E3 = 8, 16, 256
    x3 = jax.random.normal(k3, (S3, B3, E3), dtype=jnp.bfloat16)
    out3 = jax.block_until_ready(positional_encoding(x3))
    np.testing.assert_allclose(
        np.asarray(out3, dtype=np.float32), _reference(x3), rtol=2e-2, atol=5e-2
    )

    print("KERNEL_OK")
</pallas_src>

<mosaic_0001>
module attributes {stable_mosaic.version = 11 : i64} {
  func.func @_add_flat_kernel(%arg0: i32, %arg1: i32, %arg2: memref<6x128xf32, #tpu.memory_space<vmem>>, %arg3: memref<6x128xf32, #tpu.memory_space<vmem>>, %arg4: memref<6x128xf32, #tpu.memory_space<vmem>>) attributes {dimension_semantics = [#tpu.dimension_semantics<parallel>, #tpu.dimension_semantics<parallel>], iteration_bounds = array<i64: 1, 2>, scalar_prefetch = 0 : i64, scratch_operands = 0 : i64, tpu.core_type = #tpu.core_type<tc>, window_params = [{transform_indices = @transform_0, window_bounds = array<i64: 6, 128>}, {transform_indices = @transform_1, window_bounds = array<i64: 6, 128>}, {transform_indices = @transform_2, window_bounds = array<i64: 6, 128>}]} {
    %c0 = arith.constant 0 : index
    %c0_0 = arith.constant 0 : index
    %0 = vector.load %arg3[%c0, %c0_0] : memref<6x128xf32, #tpu.memory_space<vmem>>, vector<6x128xf32>
    %c0_1 = arith.constant 0 : index
    %c0_2 = arith.constant 0 : index
    %1 = vector.load %arg2[%c0_1, %c0_2] : memref<6x128xf32, #tpu.memory_space<vmem>>, vector<6x128xf32>
    %2 = arith.addf %1, %0 : vector<6x128xf32>
    %c0_3 = arith.constant 0 : index
    %c0_4 = arith.constant 0 : index
    %3 = vector.load %arg4[%c0_3, %c0_4] : memref<6x128xf32, #tpu.memory_space<vmem>>, vector<6x128xf32>
    tpu.vector_store %arg4[%c0_3, %c0_4], %2 {strides = array<i32>} : memref<6x128xf32, #tpu.memory_space<vmem>>, vector<6x128xf32>,
    return
  }
  func.func @transform_0(%arg0: i32, %arg1: i32) -> (i32, i32) {
    %c0_i32 = arith.constant 0 : i32
    return %arg0, %arg1 : i32, i32
  }
  func.func @transform_1(%arg0: i32, %arg1: i32) -> (i32, i32) {
    %c0_i32 = arith.constant 0 : i32
    %c0_i32_0 = arith.constant 0 : i32
    return %arg0, %c0_i32 : i32, i32
  }
  func.func @transform_2(%arg0: i32, %arg1: i32) -> (i32, i32) {
    %c0_i32 = arith.constant 0 : i32
    return %arg0, %arg1 : i32, i32
  }
}

</mosaic_0001>

<llo_original>
// kernel: tpu_custom_call.1
$region0: #{tpu_custom_call.1}
  #allocation0 [shape = 'u32[]', space=smem, size = 0x4, offset = 0x4, fixed_abs, tag = 'smem constant byte address 0x4 - core index']
  #allocation1 [shape = 'u32[144,128]{1,0:T(1,128)}', space=vmem, size = 0x12000, scoped, tag = 'internal scratch']
  %s0 = inlined_call_operand.hbm [shape: f32[6,256], index: 0, kind: input, shape index: {}]
  %s1 = inlined_call_operand.hbm [shape: f32[6,128], index: 1, kind: input, shape index: {}]
  %s2 = inlined_call_operand.hbm [shape: f32[6,256], index: 2, kind: output, shape index: {}]
  %s3 = sld [smem:[#allocation0]]
  $region49: #{tpu_custom_call.1} parent=0
    _
  %s5 = ssub.s32 1, %s3
  %s6 = scalar_select 0, %s5, %s3
  $region1: #{tpu_custom_call.1} parent=0
    #allocation2 [shape = 'u8[8192]{0}', space=vmem, size = 0x2000, scoped, tag = 'input window, operand 0']
    #allocation3 [shape = 's32[2]{0}', space=sflag, size = 0x8, scoped, tag = 'scoped memory for tpu_custom_call.1']
    #allocation4 [shape = 's32[2]{0}', space=sflag, size = 0x8, scoped, tag = 'scoped memory for tpu_custom_call.1']
    #allocation5 [shape = 'u8[4096]{0}', space=vmem, size = 0x1000, scoped, tag = 'input window, operand 1, single buffered']
    #allocation6 [shape = 's32[1]{0}', space=sflag, size = 0x4, scoped, tag = 'scoped memory for tpu_custom_call.1']
    #allocation7 [shape = 'u8[8192]{0}', space=vmem, size = 0x2000, scoped, tag = 'output window, operand 0']
    %7 = vsyncpa [#allocation3], 0
    %s8 = scalar_lea.sflag [#allocation3], 1
    %9 = vsyncpa %s8, 0
    %10 = vsyncpa [#allocation6], 0
    %11 = vsyncpa [#allocation4], 0
    %s12 = scalar_lea.sflag [#allocation4], 1
    %13 = vsyncpa %s12, 0
    loop: start=0, step=1, limit=4
    $region2: #{tpu_custom_call.1} parent=1 // loop_pre_header
      _
    $region3: #{tpu_custom_call.1} parent=1 // loop_header
      %s15 = sphi 0, %s19
      %p16 = scmp.ge.s32.totalorder %s15, 4
      %s22 = sphi 0, %s34
      %s23 = sphi 0, %s30
      %s24 = sphi 0, %s22
      %s25 = sphi 0, %s23
      %s26 = sphi 0, %s24
      %s27 = sphi 0, %s25
      %s39 = sphi 0, %s41
      %s42 = sphi 0, %s39
      %s43 = sphi 0, %s42
      %s59 = sphi 0, %s43
      %s65 = sphi 0, %s67
      %s68 = sphi 0, %s65
      %s69 = sphi 0, %s68
      %s85 = sphi 0, %s69
      %s93 = sphi 0, %s95
      %s96 = sphi 0, %s93
      %s97 = sphi 0, %s96
      %s113 = sphi 0, %s97
    $region4: #{tpu_custom_call.1} parent=1 // loop_header_branch
      %18 = sbr.rel (%p16) target = $region8
    $region5: #{tpu_custom_call.1} parent=1 // loop_body
      %s20 = ssub.s32 %s15, 1
      %s21 = ssub.s32 %s15, 2
      %s28 = sadd.s32 1, %s23
      %p29 = scmp.ge.s32.totalorder %s28, 2
      %s30 = scalar_select %p29, 0, %s28
      %s31 = sadd.s32 1, %s22
      %s32 = scalar_select %p29, %s31, %s22
      %p33 = scmp.ge.s32.totalorder %s32, 1
      %s34 = scalar_select %p33, 0, %s32
      %s35 = ssub.s32 %s22, %s34
      %s36 = ssub.s32 %s23, %s30
      %s37 = sor.u32 %s35, %s36
      %p38 = scmp.eq.s32.totalorder %s37, 0
      %s40 = sadd.s32 %s39, 1
      %s41 = scalar_select %p38, %s39, %s40
      %p44 = pneg %p38
      %p45 = scmp.eq.s32.totalorder %s15, 1
      %p46 = por %p44, %p45
      %p47 = scmp.ne.s32.totalorder %s39, %s42
      %p48 = scmp.eq.s32.totalorder %s15, 0
      %p49 = por %p47, %p48
      %p50 = scmp.ne.s32.totalorder %s39, %s42
      %p51 = scmp.eq.s32.totalorder %s20, 1
      %p52 = por %p50, %p51
      %p53 = scmp.ne.s32.totalorder %s42, %s43
      %p54 = scmp.eq.s32.totalorder %s20, 0
      %p55 = por %p53, %p54
      %p56 = scmp.ne.s32.totalorder %s42, %s43
      %p57 = scmp.eq.s32.totalorder %s21, 1
      %p58 = por %p56, %p57
      %p60 = scmp.ne.s32.totalorder %s43, %s59
      %p61 = scmp.eq.s32.totalorder %s21, 0
      %p62 = por %p60, %p61
      %s63 = ssub.s32 %s22, %s34
      %p64 = scmp.eq.s32.totalorder %s63, 0
      %s66 = sadd.s32 %s65, 1
      %s67 = scalar_select %p64, %s65, %s66
      %p70 = pneg %p64
      %p71 = scmp.eq.s32.totalorder %s15, 1
      %p72 = por %p70, %p71
      %p73 = scmp.ne.s32.totalorder %s65, %s68
      %p74 = scmp.eq.s32.totalorder %s15, 0
      %p75 = por %p73, %p74
      %p76 = scmp.ne.s32.totalorder %s65, %s68
      %p77 = scmp.eq.s32.totalorder %s20, 1
      %p78 = por %p76, %p77
      %p79 = scmp.ne.s32.totalorder %s68, %s69
      %p80 = scmp.eq.s32.totalorder %s20, 0
      %p81 = por %p79, %p80
      %p82 = scmp.ne.s32.totalorder %s68, %s69
      %p83 = scmp.eq.s32.totalorder %s21, 1
      %p84 = por %p82, %p83
      %p86 = scmp.ne.s32.totalorder %s69, %s85
      %p87 = scmp.eq.s32.totalorder %s21, 0
      %p88 = por %p86, %p87
      %s89 = ssub.s32 %s22, %s34
      %s90 = ssub.s32 %s23, %s30
      %s91 = sor.u32 %s89, %s90
      %p92 = scmp.eq.s32.totalorder %s91, 0
      %s94 = sadd.s32 %s93, 1
      %s95 = scalar_select %p92, %s93, %s94
      %p98 = pneg %p92
      %p99 = scmp.eq.s32.totalorder %s15, 1
      %p100 = por %p98, %p99
      %p101 = scmp.ne.s32.totalorder %s93, %s96
      %p102 = scmp.eq.s32.totalorder %s15, 0
      %p103 = por %p101, %p102
      %p104 = scmp.ne.s32.totalorder %s93, %s96
      %p105 = scmp.eq.s32.totalorder %s20, 1
      %p106 = por %p104, %p105
      %p107 = scmp.ne.s32.totalorder %s96, %s97
      %p108 = scmp.eq.s32.totalorder %s20, 0
      %p109 = por %p107, %p108
      %p110 = scmp.ne.s32.totalorder %s96, %s97
      %p111 = scmp.eq.s32.totalorder %s21, 1
      %p112 = por %p110, %p111
      %p114 = scmp.ne.s32.totalorder %s97, %s113
      %p115 = scmp.eq.s32.totalorder %s21, 0
      %p116 = por %p114, %p115
      %p117 = scmp.le.s32.totalorder 1, %s15
      %p118 = scmp.lt.s32.totalorder %s15, 3
      %p119 = pnand %p117, %p118
      %p120 = pneg %p119
      // Predicated region
      $region9: #{tpu_custom_call.1} parent=5 // pred_check
        _
      $region10: #{tpu_custom_call.1} parent=5 // pred_check_branch
        %122 = sbr.rel (%p119) target = $region12
      $region11: #{tpu_custom_call.1} parent=5 // pred_region
        %s123 = ssub.s32 %s15, 1
        // Predicated region
        $region13: #{tpu_custom_call.1} parent=11 // pred_check
          %p124 = pneg %p81
        $region14: #{tpu_custom_call.1} parent=11 // pred_check_branch
          %126 = sbr.rel (%p124) target = $region16
        $region15: #{tpu_custom_call.1} parent=11 // pred_region
          %s128 = ssub.s32 128, 128
          %129 = vsyncadd [#allocation6], %s128
          %s130 = smul.addr %s24, 128
          %s131 = scalar_lea.hbm %s1, %s130
          %s133 = sshll.u32 [#allocation5], 4
          %s134 = int_to_ptr.vmem [resolvable:$true] %s133
          %136 = dma.hbm_to_vmem [thread:$0]  %s131, 128, %s134, [#allocation6]
        $region16: #{tpu_custom_call.1} parent=11 // pred_fallthru
          _
      $region12: #{tpu_custom_call.1} parent=5 // pred_fallthru
        _
      %p137 = scmp.lt.s32.totalorder %s15, 2
      // Predicated region
      $region17: #{tpu_custom_call.1} parent=5 // pred_check
        %p138 = pneg %p137
      $region18: #{tpu_custom_call.1} parent=5 // pred_check_branch
        %140 = sbr.rel (%p138) target = $region20
      $region19: #{tpu_custom_call.1} parent=5 // pred_region
        // Predicated region
        $region21: #{tpu_custom_call.1} parent=19 // pred_check
          %p141 = pneg %p49
        $region22: #{tpu_custom_call.1} parent=19 // pred_check_branch
          %143 = sbr.rel (%p141) target = $region24
        $region23: #{tpu_custom_call.1} parent=19 // pred_region
          %s144 = sand.u32 %s39, 1
          %s145 = scalar_lea.sflag [#allocation3], %s144
          %s146 = sand.u32 %s39, 1
          %s147 = smul.addr %s146, 8
          %s148 = scalar_lea.vmem [#allocation2], %s147
          %s150 = ssub.s32 128, 128
          %151 = vsyncadd %s145, %s150
          %s152 = smul.addr %s22, 2
          %s153 = sadd.s32 %s23, %s152
          %s154 = smul.addr %s153, 128
          %s155 = scalar_lea.hbm %s0, %s154
          %s157 = sshll.u32 %s148, 4
          %s158 = int_to_ptr.vmem [resolvable:$true] %s157
          %160 = dma.hbm_to_vmem [thread:$0]  %s155, 128, %s158, %s145
        $region24: #{tpu_custom_call.1} parent=19 // pred_fallthru
          _
      $region20: #{tpu_custom_call.1} parent=5 // pred_fallthru
        _
      %p161 = scmp.le.s32.totalorder 1, %s15
      %p162 = scmp.lt.s32.totalorder %s15, 3
      %p163 = pnand %p161, %p162
      %p164 = pneg %p163
      // Predicated region
      $region25: #{tpu_custom_call.1} parent=5 // pred_check
        _
      $region26: #{tpu_custom_call.1} parent=5 // pred_check_branch
        %166 = sbr.rel (%p163) target = $region28
      $region27: #{tpu_custom_call.1} parent=5 // pred_region
        %s167 = ssub.s32 %s15, 1
        %s168 = sand.u32 %s42, 1
        %s169 = scalar_lea.sflag [#allocation3], %s168
        %s170 = sand.u32 %s42, 1
        %s171 = smul.addr %s170, 8
        %s172 = scalar_lea.vmem [#allocation2], %s171
        // Predicated region
        $region29: #{tpu_custom_call.1} parent=27 // pred_check
          %p173 = pneg %p55
        $region30: #{tpu_custom_call.1} parent=27 // pred_check_branch
          %175 = sbr.rel (%p173) target = $region32
        $region31: #{tpu_custom_call.1} parent=27 // pred_region
          %176 = dma.done %s169, 128
        $region32: #{tpu_custom_call.1} parent=27 // pred_fallthru
          _
        // Predicated region
        $region33: #{tpu_custom_call.1} parent=27 // pred_check
          %p177 = pneg %p81
        $region34: #{tpu_custom_call.1} parent=27 // pred_check_branch
          %179 = sbr.rel (%p177) target = $region36
        $region35: #{tpu_custom_call.1} parent=27 // pred_region
          %180 = dma.done [#allocation6], 128
        $region36: #{tpu_custom_call.1} parent=27 // pred_fallthru
          _
        %s181 = sand.u32 %s42, 1
        %s182 = scalar_lea.sflag [#allocation3], %s181
        %s183 = sand.u32 %s42, 1
        %s184 = smul.addr %s183, 8
        %s185 = scalar_lea.vmem [#allocation2], %s184
        %p186 = pneg %p55
        %p187 = pneg %p52
        %p188 = pneg %p81
        %p189 = pneg %p78
        %p190 = pneg %p109
        %p191 = pneg %p106
        %s192 = sand.u32 %s96, 1
        %s193 = scalar_lea.sflag [#allocation4], %s192
        %s194 = sand.u32 %s96, 1
        %s195 = smul.addr %s194, 8
        %s196 = scalar_lea.vmem [#allocation7], %s195
        %v197 = vld [vmem:[#allocation5] sm:$0x3f]
        %v198 = vld [vmem:[%s172] sm:$0x3f]
        %v199 = vadd.f32 %v198, %v197
        %200 = vst [vmem:[%s196] sm:$0x3f] %v199
        %s201 = sand.u32 %s96, 1
        %s202 = scalar_lea.sflag [#allocation4], %s201
        %s203 = sand.u32 %s96, 1
        %s204 = smul.addr %s203, 8
        %s205 = scalar_lea.vmem [#allocation7], %s204
        // Predicated region
        $region37: #{tpu_custom_call.1} parent=27 // pred_check
          %p206 = pneg %p106
        $region38: #{tpu_custom_call.1} parent=27 // pred_check_branch
          %208 = sbr.rel (%p206) target = $region40
        $region39: #{tpu_custom_call.1} parent=27 // pred_region
          %s210 = ssub.s32 128, 128
          %211 = vsyncadd %s202, %s210
          %s212 = smul.addr %s24, 2
          %s213 = sadd.s32 %s25, %s212
          %s214 = smul.addr %s213, 128
          %s215 = scalar_lea.hbm %s2, %s214
          %s217 = sshll.u32 %s205, 4
          %s218 = int_to_ptr.vmem [resolvable:$true] %s217
          %220 = dma.vmem_to_hbm [thread:$0]  %s218, 128, %s215, %s202
        $region40: #{tpu_custom_call.1} parent=27 // pred_fallthru
          _
      $region28: #{tpu_custom_call.1} parent=5 // pred_fallthru
        _
      %p221 = scmp.le.s32.totalorder 2, %s15
      // Predicated region
      $region41: #{tpu_custom_call.1} parent=5 // pred_check
        %p222 = pneg %p221
      $region42: #{tpu_custom_call.1} parent=5 // pred_check_branch
        %224 = sbr.rel (%p222) target = $region44
      $region43: #{tpu_custom_call.1} parent=5 // pred_region
        %s225 = ssub.s32 %s15, 2
        // Predicated region
        $region45: #{tpu_custom_call.1} parent=43 // pred_check
          %p226 = pneg %p112
        $region46: #{tpu_custom_call.1} parent=43 // pred_check_branch
          %228 = sbr.rel (%p226) target = $region48
        $region47: #{tpu_custom_call.1} parent=43 // pred_region
          %s229 = sand.u32 %s97, 1
          %s230 = scalar_lea.sflag [#allocation4], %s229
          %s231 = sand.u32 %s97, 1
          %s232 = smul.addr %s231, 8
          %s233 = scalar_lea.vmem [#allocation7], %s232
          %234 = dma.done %s230, 128
        $region48: #{tpu_custom_call.1} parent=43 // pred_fallthru
          _
      $region44: #{tpu_custom_call.1} parent=5 // pred_fallthru
        _
    $region6: #{tpu_custom_call.1} parent=1 // loop_footer
      %s19 = sadd.s32 1, %s15
    $region7: #{tpu_custom_call.1} parent=1 // loop_footer_branch
      %14 = sbr.rel target = $region3
    $region8: #{tpu_custom_call.1} parent=1 // loop_exit
      _
    %235 = vsyncpa [#allocation3], 1
    %s236 = scalar_lea.sflag [#allocation3], 1
    %237 = vsyncpa %s236, 1
    %238 = vsyncpa [#allocation6], 1
    %239 = vsyncpa [#allocation4], 1
    %s240 = scalar_lea.sflag [#allocation4], 1
    %241 = vsyncpa %s240, 1

</llo_original>
